<compile_context>
chip_gen: v7x
topology: tpu7x:2x2x1
jax: 0.10.0
libtpu: 0.0.40
codegen_flags: <defaults>
</compile_context>

<pallas_src>
import functools
import math

import jax
import jax.numpy as jnp
import numpy as np
from jax.experimental import pallas as pl
from jax.experimental.pallas import tpu as pltpu


_CHUNK_ROWS = 32  # sublane rows per in-kernel compute chunk (4 vregs / plane)


def _proj_fov_kernel(r_ref, bias_ref, v_ref, o_ref, *, chunk):
    """Project one (1, 3, TS, 128) SoA tile of vertices.

    r_ref:    (B, 9) f32 SMEM - per-batch R, rows 0/1 pre-scaled by 1/width
    bias_ref: (B, 3) f32 SMEM - per-batch  -(R_scaled @ t)
    v_ref:    (1, 3, TS, 128) VMEM block (x/y/z planes, sublane/lane dense)
    o_ref:    (1, 3, TS, 128) VMEM block (x/z/width, y/z/width, z)
    """
    b = pl.program_id(0)
    r = [r_ref[b, k] for k in range(9)]       # 12 cheap SMEM scalar loads,
    c = [bias_ref[b, k] for k in range(3)]    # hoisted out of the chunk loop
    ts = v_ref.shape[2]

    def do_rows(i, n):
        vx = v_ref[0, 0, pl.ds(i, n), :]
        vy = v_ref[0, 1, pl.ds(i, n), :]
        vz = v_ref[0, 2, pl.ds(i, n), :]
        # (v - t) @ R^T  ==  R_scaled @ v + bias  as scalar-broadcast VPU FMAs
        # (a 3x3 MXU matmul would waste the unit at K = N = 3).
        ox = r[0] * vx + r[1] * vy + r[2] * vz + c[0]
        oy = r[3] * vx + r[4] * vy + r[5] * vz + c[1]
        oz = r[6] * vx + r[7] * vy + r[8] * vz + c[2]
        # One shared exact reciprocal + 2 muls instead of 4 chained divides.
        # approx=True alone (~2e-4 rel err) would violate the 1e-5 tolerance;
        # only switch to approx + one Newton step if a bundle dump shows VALU
        # as the binding slot (v7x).
        inv_z = pl.reciprocal(oz, approx=False)
        o_ref[0, 0, pl.ds(i, n), :] = ox * inv_z
        o_ref[0, 1, pl.ds(i, n), :] = oy * inv_z
        o_ref[0, 2, pl.ds(i, n), :] = oz

    # Chunked compute: caps live vregs (~28) independently of the DMA block
    # size, so large blocks buy DMA efficiency without spill/vst pressure.
    n_full = ts // chunk
    rem = ts % chunk
    if n_full > 0:
        @pl.loop(0, n_full)
        def _(step):
            do_rows(pl.multiple_of(step * chunk, chunk), chunk)
    if rem:
        do_rows(n_full * chunk, rem)


def _pick_tile_rows(S, B, max_rows):
    """Sublane-row tile size.

    Big tiles (default up to 1024 rows -> 1.5 MiB/block, 6 MiB double-buffered
    in+out) amortize the ~0.35 us per-step overhead toward HBM roofline.  The
    tile is always a multiple of 8 (or the full, small S), never an unbounded
    whole-row fallback, so VMEM stays bounded even on v7x (64 MiB physical).
    When B == 1 the tile is capped so the grid keeps >= 2 steps for megacore.
    """
    max_rows = max(8, (max_rows // 8) * 8)
    ts = S if S <= max_rows else max_rows
    if B == 1 and ts >= S and S >= 16:
        ts = min(ts, (((S + 1) // 2) + 7) // 8 * 8)
    return ts


def projection_fov_soa(v_soa, R, t, width, *, max_tile_rows=1024):
    """Transpose-free fast path. v_soa: (B, 3, N) f32 with N % 128 == 0."""
    B, C, N = v_soa.shape
    assert C == 3 and N % 128 == 0
    S = N // 128
    TS = _pick_tile_rows(S, B, max_tile_rows)
    dtype = v_soa.dtype
    itemsize = jnp.dtype(dtype).itemsize

    # Fold 1/width into rows 0 and 1 of R; fold the translation into a
    # rotation-space bias:  R_scaled @ (v - t) = R_scaled @ v - R_scaled @ t.
    # (Elementwise mul+sum, not einsum/matmul, to keep full f32 precision.)
    scale = jnp.asarray([1.0 / width, 1.0 / width, 1.0], dtype).reshape(1, 3, 1)
    r_scaled = R.astype(dtype) * scale                                  # (B,3,3)
    r_flat = r_scaled.reshape(B, 9)
    bias = -jnp.sum(r_scaled * t.astype(dtype)[:, None, :], axis=-1)    # (B,3)

    v4 = v_soa.reshape(B, 3, S, 128)      # free reshape: contiguous split of N

    grid_s = pl.cdiv(S, TS)               # partial last block handled by Pallas
    block_bytes = 3 * TS * 128 * itemsize
    # in + out, double-buffered, plus headroom; explicit so big tiles never hit
    # v5e's 16 MiB scoped-VMEM default nor v7x's 32 MiB scoped / 64 MiB phys.
    vmem_limit = int(min(4 * block_bytes + (2 << 20), 32 << 20))

    out4 = pl.pallas_call(
        functools.partial(_proj_fov_kernel, chunk=_CHUNK_ROWS),
        out_shape=jax.ShapeDtypeStruct((B, 3, S, 128), dtype),
        grid_spec=pltpu.PrefetchScalarGridSpec(
            num_scalar_prefetch=0,
            grid=(B, grid_s),
            in_specs=[
                pl.BlockSpec(memory_space=pltpu.SMEM),                     # R (B, 9)
                pl.BlockSpec(memory_space=pltpu.SMEM),                     # bias (B, 3)
                pl.BlockSpec((1, 3, TS, 128), lambda b, s: (b, 0, s, 0)),  # vertices
            ],
            out_specs=pl.BlockSpec((1, 3, TS, 128), lambda b, s: (b, 0, s, 0)),
        ),
        compiler_params=pltpu.CompilerParams(
            dimension_semantics=("parallel", "parallel"),
            vmem_limit_bytes=vmem_limit),
        cost_estimate=pl.CostEstimate(
            flops=20 * B * N,
            transcendentals=B * N,
            bytes_accessed=2 * B * 3 * N * itemsize),
    )(r_flat, bias, v4)
    return out4.reshape(B, 3, N)


def projection_fov(vertices, R, t, fov, *, max_tile_rows=1024):
    """Module-interface path. vertices: (B, N, 3), R: (B, 3, 3), t: (B, 3)."""
    B, N, C = vertices.shape
    assert C == 3
    width = math.tan(fov / 2)

    # Pad N up to a multiple of 128 with z=1 points (no inf/nan in padding);
    # jnp.pad fuses into the transpose copy below, so there is no separate
    # concatenate HBM pass.
    Np = ((N + 127) // 128) * 128
    if Np != N:
        vertices = jnp.pad(vertices, ((0, 0), (0, Np - N), (0, 0)),
                           constant_values=1.0)

    # TODO(synk): the two transposes below are pure AoS<->SoA layout glue (one
    # extra HBM pass each way); an in-kernel deinterleave of the (.,3) minor
    # dim would need lane-sparse DMAs / stride-3 lane shuffles, so callers that
    # already own SoA data should call projection_fov_soa directly.
    v_soa = jnp.transpose(vertices, (0, 2, 1))                  # (B, 3, Np)
    out_soa = projection_fov_soa(v_soa, R, t, width, max_tile_rows=max_tile_rows)
    out = jnp.transpose(out_soa, (0, 2, 1))                     # (B, Np, 3)
    return out[:, :N, :] if Np != N else out


def _reference(vertices, R, t, fov):
    width = math.tan(fov / 2)
    v = vertices - t.reshape(-1, 1, 3)
    v = jnp.matmul(v, jnp.transpose(R, (0, 2, 1)),
                   precision=jax.lax.Precision.HIGHEST)
    z = v[:, :, 2]
    x = v[:, :, 0] / z / width
    y = v[:, :, 1] / z / width
    return jnp.stack((x, y, z), axis=2)


def _rot_z(angles):
    mats = []
    for a in angles:
        ca, sa = math.cos(a), math.sin(a)
        mats.append([[ca, -sa, 0.0], [sa, ca, 0.0], [0.0, 0.0, 1.0]])
    return jnp.asarray(mats, jnp.float32)


if __name__ == "__main__":
    fov = math.radians(60.0)
    proj = jax.jit(functools.partial(projection_fov, fov=fov))

    key = jax.random.PRNGKey(0)
    k1, k2, k3, k4 = jax.random.split(key, 4)

    # Test 1: small shapes matching the module's (B, N, 3) API.
    B, N = 2, 256
    xy = jax.random.uniform(k1, (B, N, 2), jnp.float32, -0.5, 0.5)
    z = jax.random.uniform(k2, (B, N, 1), jnp.float32, 2.0, 3.0)  # z away from 0
    v1 = jnp.concatenate([xy, z], axis=-1)                        # (B, N, 3)
    R1 = _rot_z([0.1, -0.25])
    t1 = jnp.asarray([[0.1, -0.2, 0.0], [0.0, 0.1, -0.1]], jnp.float32)

    out1 = jax.block_until_ready(proj(v1, R1, t1))
    np.testing.assert_allclose(np.asarray(out1),
                               np.asarray(_reference(v1, R1, t1, fov)),
                               rtol=1e-5, atol=1e-5)

    # Test 2: B=1, larger N — exercises the in-kernel chunk loop, the chunk
    # tail, and the B==1 megacore tile cap (grid keeps 2 steps).
    B2, N2 = 1, 96 * 128
    xy2 = jax.random.uniform(k3, (B2, N2, 2), jnp.float32, -0.5, 0.5)
    z2 = jax.random.uniform(k4, (B2, N2, 1), jnp.float32, 2.0, 3.0)
    v2 = jnp.concatenate([xy2, z2], axis=-1)
    R2 = _rot_z([0.3])
    t2 = jnp.asarray([[0.05, 0.02, -0.1]], jnp.float32)

    out2 = jax.block_until_ready(proj(v2, R2, t2))
    np.testing.assert_allclose(np.asarray(out2),
                               np.asarray(_reference(v2, R2, t2, fov)),
                               rtol=1e-5, atol=1e-5)

    print("KERNEL_OK")
</pallas_src>

<mosaic_0001>
module attributes {stable_mosaic.version = 11 : i64} {
  func.func @_proj_fov_kernel(%arg0: i32, %arg1: i32, %arg2: memref<2x9xf32, #tpu.memory_space<smem>>, %arg3: memref<2x3xf32, #tpu.memory_space<smem>>, %arg4: memref<1x3x2x128xf32, #tpu.memory_space<vmem>>, %arg5: memref<1x3x2x128xf32, #tpu.memory_space<vmem>>) attributes {dimension_semantics = [#tpu.dimension_semantics<parallel>, #tpu.dimension_semantics<parallel>], iteration_bounds = array<i64: 2, 1>, scalar_prefetch = 0 : i64, scratch_operands = 0 : i64, tpu.core_type = #tpu.core_type<tc>, window_params = [{transform_indices = @transform_0, window_bounds = array<i64: 2, 9>}, {transform_indices = @transform_1, window_bounds = array<i64: 2, 3>}, {transform_indices = @transform_2, window_bounds = array<i64: 1, 3, 2, 128>}, {transform_indices = @transform_3, window_bounds = array<i64: 1, 3, 2, 128>}]} {
    %0 = arith.index_cast %arg0 : i32 to index
    %c0 = arith.constant 0 : index
    %1 = memref.load %arg2[%0, %c0] : memref<2x9xf32, #tpu.memory_space<smem>>
    %2 = arith.index_cast %arg0 : i32 to index
    %c1 = arith.constant 1 : index
    %3 = memref.load %arg2[%2, %c1] : memref<2x9xf32, #tpu.memory_space<smem>>
    %4 = arith.index_cast %arg0 : i32 to index
    %c2 = arith.constant 2 : index
    %5 = memref.load %arg2[%4, %c2] : memref<2x9xf32, #tpu.memory_space<smem>>
    %6 = arith.index_cast %arg0 : i32 to index
    %c3 = arith.constant 3 : index
    %7 = memref.load %arg2[%6, %c3] : memref<2x9xf32, #tpu.memory_space<smem>>
    %8 = arith.index_cast %arg0 : i32 to index
    %c4 = arith.constant 4 : index
    %9 = memref.load %arg2[%8, %c4] : memref<2x9xf32, #tpu.memory_space<smem>>
    %10 = arith.index_cast %arg0 : i32 to index
    %c5 = arith.constant 5 : index
    %11 = memref.load %arg2[%10, %c5] : memref<2x9xf32, #tpu.memory_space<smem>>
    %12 = arith.index_cast %arg0 : i32 to index
    %c6 = arith.constant 6 : index
    %13 = memref.load %arg2[%12, %c6] : memref<2x9xf32, #tpu.memory_space<smem>>
    %14 = arith.index_cast %arg0 : i32 to index
    %c7 = arith.constant 7 : index
    %15 = memref.load %arg2[%14, %c7] : memref<2x9xf32, #tpu.memory_space<smem>>
    %16 = arith.index_cast %arg0 : i32 to index
    %c8 = arith.constant 8 : index
    %17 = memref.load %arg2[%16, %c8] : memref<2x9xf32, #tpu.memory_space<smem>>
    %18 = arith.index_cast %arg0 : i32 to index
    %c0_0 = arith.constant 0 : index
    %19 = memref.load %arg3[%18, %c0_0] : memref<2x3xf32, #tpu.memory_space<smem>>
    %20 = arith.index_cast %arg0 : i32 to index
    %c1_1 = arith.constant 1 : index
    %21 = memref.load %arg3[%20, %c1_1] : memref<2x3xf32, #tpu.memory_space<smem>>
    %22 = arith.index_cast %arg0 : i32 to index
    %c2_2 = arith.constant 2 : index
    %23 = memref.load %arg3[%22, %c2_2] : memref<2x3xf32, #tpu.memory_space<smem>>
    %c0_3 = arith.constant 0 : index
    %c0_4 = arith.constant 0 : index
    %c0_5 = arith.constant 0 : index
    %c0_6 = arith.constant 0 : index
    %24 = vector.load %arg4[%c0_3, %c0_4, %c0_5, %c0_6] : memref<1x3x2x128xf32, #tpu.memory_space<vmem>>, vector<1x1x2x128xf32>
    %25 = vector.shape_cast %24 : vector<1x1x2x128xf32> to vector<2x128xf32>
    %c0_7 = arith.constant 0 : index
    %c1_8 = arith.constant 1 : index
    %c0_9 = arith.constant 0 : index
    %c0_10 = arith.constant 0 : index
    %26 = vector.load %arg4[%c0_7, %c1_8, %c0_9, %c0_10] : memref<1x3x2x128xf32, #tpu.memory_space<vmem>>, vector<1x1x2x128xf32>
    %27 = vector.shape_cast %26 : vector<1x1x2x128xf32> to vector<2x128xf32>
    %c0_11 = arith.constant 0 : index
    %c2_12 = arith.constant 2 : index
    %c0_13 = arith.constant 0 : index
    %c0_14 = arith.constant 0 : index
    %28 = vector.load %arg4[%c0_11, %c2_12, %c0_13, %c0_14] : memref<1x3x2x128xf32, #tpu.memory_space<vmem>>, vector<1x1x2x128xf32>
    %29 = vector.shape_cast %28 : vector<1x1x2x128xf32> to vector<2x128xf32>
    %30 = vector.broadcast %1 : f32 to vector<2x128xf32>
    %31 = arith.mulf %30, %25 : vector<2x128xf32>
    %32 = vector.broadcast %3 : f32 to vector<2x128xf32>
    %33 = arith.mulf %32, %27 : vector<2x128xf32>
    %34 = arith.addf %31, %33 : vector<2x128xf32>
    %35 = vector.broadcast %5 : f32 to vector<2x128xf32>
    %36 = arith.mulf %35, %29 : vector<2x128xf32>
    %37 = arith.addf %34, %36 : vector<2x128xf32>
    %38 = vector.broadcast %19 : f32 to vector<2x128xf32>
    %39 = arith.addf %37, %38 : vector<2x128xf32>
    %40 = vector.broadcast %7 : f32 to vector<2x128xf32>
    %41 = arith.mulf %40, %25 : vector<2x128xf32>
    %42 = vector.broadcast %9 : f32 to vector<2x128xf32>
    %43 = arith.mulf %42, %27 : vector<2x128xf32>
    %44 = arith.addf %41, %43 : vector<2x128xf32>
    %45 = vector.broadcast %11 : f32 to vector<2x128xf32>
    %46 = arith.mulf %45, %29 : vector<2x128xf32>
    %47 = arith.addf %44, %46 : vector<2x128xf32>
    %48 = vector.broadcast %21 : f32 to vector<2x128xf32>
    %49 = arith.addf %47, %48 : vector<2x128xf32>
    %50 = vector.broadcast %13 : f32 to vector<2x128xf32>
    %51 = arith.mulf %50, %25 : vector<2x128xf32>
    %52 = vector.broadcast %15 : f32 to vector<2x128xf32>
    %53 = arith.mulf %52, %27 : vector<2x128xf32>
    %54 = arith.addf %51, %53 : vector<2x128xf32>
    %55 = vector.broadcast %17 : f32 to vector<2x128xf32>
    %56 = arith.mulf %55, %29 : vector<2x128xf32>
    %57 = arith.addf %54, %56 : vector<2x128xf32>
    %58 = vector.broadcast %23 : f32 to vector<2x128xf32>
    %59 = arith.addf %57, %58 : vector<2x128xf32>
    %60 = tpu.reciprocal %59 : vector<2x128xf32> -> vector<2x128xf32>
    %61 = arith.mulf %39, %60 : vector<2x128xf32>
    %c0_15 = arith.constant 0 : index
    %c0_16 = arith.constant 0 : index
    %c0_17 = arith.constant 0 : index
    %c0_18 = arith.constant 0 : index
    %62 = vector.load %arg5[%c0_15, %c0_16, %c0_17, %c0_18] : memref<1x3x2x128xf32, #tpu.memory_space<vmem>>, vector<1x1x2x128xf32>
    %63 = vector.shape_cast %62 : vector<1x1x2x128xf32> to vector<2x128xf32>
    %64 = vector.shape_cast %61 : vector<2x128xf32> to vector<1x1x2x128xf32>
    tpu.vector_store %arg5[%c0_15, %c0_16, %c0_17, %c0_18], %64 {strides = array<i32>} : memref<1x3x2x128xf32, #tpu.memory_space<vmem>>, vector<1x1x2x128xf32>,
    %65 = arith.mulf %49, %60 : vector<2x128xf32>
    %c0_19 = arith.constant 0 : index
    %c1_20 = arith.constant 1 : index
    %c0_21 = arith.constant 0 : index
    %c0_22 = arith.constant 0 : index
    %66 = vector.load %arg5[%c0_19, %c1_20, %c0_21, %c0_22] : memref<1x3x2x128xf32, #tpu.memory_space<vmem>>, vector<1x1x2x128xf32>
    %67 = vector.shape_cast %66 : vector<1x1x2x128xf32> to vector<2x128xf32>
    %68 = vector.shape_cast %65 : vector<2x128xf32> to vector<1x1x2x128xf32>
    tpu.vector_store %arg5[%c0_19, %c1_20, %c0_21, %c0_22], %68 {strides = array<i32>} : memref<1x3x2x128xf32, #tpu.memory_space<vmem>>, vector<1x1x2x128xf32>,
    %c0_23 = arith.constant 0 : index
    %c2_24 = arith.constant 2 : index
    %c0_25 = arith.constant 0 : index
    %c0_26 = arith.constant 0 : index
    %69 = vector.load %arg5[%c0_23, %c2_24, %c0_25, %c0_26] : memref<1x3x2x128xf32, #tpu.memory_space<vmem>>, vector<1x1x2x128xf32>
    %70 = vector.shape_cast %69 : vector<1x1x2x128xf32> to vector<2x128xf32>
    %71 = vector.shape_cast %59 : vector<2x128xf32> to vector<1x1x2x128xf32>
    tpu.vector_store %arg5[%c0_23, %c2_24, %c0_25, %c0_26], %71 {strides = array<i32>} : memref<1x3x2x128xf32, #tpu.memory_space<vmem>>, vector<1x1x2x128xf32>,
    return
  }
  func.func @transform_0(%arg0: i32, %arg1: i32) -> (i32, i32) {
    %c0_i32 = arith.constant 0 : i32
    %c0_i32_0 = arith.constant 0 : i32
    %c0_i32_1 = arith.constant 0 : i32
    return %c0_i32, %c0_i32_0 : i32, i32
  }
  func.func @transform_1(%arg0: i32, %arg1: i32) -> (i32, i32) {
    %c0_i32 = arith.constant 0 : i32
    %c0_i32_0 = arith.constant 0 : i32
    %c0_i32_1 = arith.constant 0 : i32
    return %c0_i32, %c0_i32_0 : i32, i32
  }
  func.func @transform_2(%arg0: i32, %arg1: i32) -> (i32, i32, i32, i32) {
    %c0_i32 = arith.constant 0 : i32
    %c0_i32_0 = arith.constant 0 : i32
    %c0_i32_1 = arith.constant 0 : i32
    return %arg0, %c0_i32, %arg1, %c0_i32_0 : i32, i32, i32, i32
  }
  func.func @transform_3(%arg0: i32, %arg1: i32) -> (i32, i32, i32, i32) {
    %c0_i32 = arith.constant 0 : i32
    %c0_i32_0 = arith.constant 0 : i32
    %c0_i32_1 = arith.constant 0 : i32
    return %arg0, %c0_i32, %arg1, %c0_i32_0 : i32, i32, i32, i32
  }
}

</mosaic_0001>

<llo_original>
// kernel: neg.1
$region0: #{neg.1}
  #allocation0 [shape = 's32[1]{0}', space=sflag, size = 0x4, scoped, tag = 'scoped memory for neg.1']
  %s0 = inlined_call_operand.vmem [shape: f32[2,3], index: 0, kind: input, shape index: {}]
  %s1 = inlined_call_operand.vmem [shape: f32[2,3], index: 1, kind: output, shape index: {}]
  %v2 = vld [vmem:[%s0] sm:$0x3]
  %3 = xla_tuple %v2
  %4 = xla_tuple %3
  %v5 = vxor.u32 %v2, 2147483648
  %6 = xla_tuple %v5
  %7 = vst [vmem:[%s1] sm:$0x3] %v5

// kernel: projection_fov.1
$region0: #{projection_fov.1}
  #allocation0 [shape = 'u32[]', space=smem, size = 0x4, offset = 0x4, fixed_abs, tag = 'smem constant byte address 0x4 - core index']
  #allocation1 [shape = 'u32[144,128]{1,0:T(1,128)}', space=vmem, size = 0x12000, scoped, tag = 'internal scratch']
  %s0 = inlined_call_operand.vmem [shape: f32[2,9], index: 0, kind: input, shape index: {}]
  %s1 = inlined_call_operand.vmem [shape: f32[2,3], index: 1, kind: input, shape index: {}]
  %s2 = inlined_call_operand.vmem [shape: f32[2,3,2,128], index: 2, kind: input, shape index: {}]
  %s3 = inlined_call_operand.vmem [shape: f32[2,3,2,128], index: 3, kind: output, shape index: {}]
  %s4 = sld [smem:[#allocation0]]
  $region53: #{projection_fov.1} parent=0
    _
  %s6 = ssub.s32 1, %s4
  %s7 = scalar_select 0, %s6, %s4
  $region1: #{projection_fov.1} parent=0
    #allocation2 [shape = 'u8[1024]{0}', space=smem, size = 0x400, scoped, tag = 'input window, operand 0, single buffered']
    #allocation3 [shape = 's32[2]{0}', space=sflag, size = 0x8, scoped, tag = 'scoped memory for projection_fov.1']
    #allocation4 [shape = 'u8[1024]{0}', space=smem, size = 0x400, scoped, tag = 'input window, operand 1, single buffered']
    #allocation5 [shape = 's32[1]{0}', space=sflag, size = 0x4, scoped, tag = 'scoped memory for projection_fov.1']
    %8 = vsyncpa [#allocation3], 0
    %9 = vsyncpa [#allocation5], 0
    loop: start=0, step=1, limit=4
    $region2: #{projection_fov.1} parent=1 // loop_pre_header
      _
    $region3: #{projection_fov.1} parent=1 // loop_header
      %s11 = sphi 0, %s15
      %p12 = scmp.ge.s32.totalorder %s11, 4
      %s18 = sphi 0, %s30
      %s19 = sphi 0, %s26
      %s20 = sphi 0, %s18
      %s21 = sphi 0, %s19
      %s22 = sphi 0, %s20
      %s23 = sphi 0, %s21
      %s31 = sphi 0, %s31
      %s33 = sphi 0, %s31
      %s34 = sphi 0, %s33
      %s48 = sphi 0, %s34
      %s52 = sphi 0, %s52
      %s54 = sphi 0, %s52
      %s55 = sphi 0, %s54
      %s69 = sphi 0, %s55
      %s77 = sphi 0, %s79
      %s80 = sphi 0, %s77
      %s81 = sphi 0, %s80
      %s97 = sphi 0, %s81
      %s105 = sphi 0, %s107
      %s108 = sphi 0, %s105
      %s109 = sphi 0, %s108
      %s125 = sphi 0, %s109
    $region4: #{projection_fov.1} parent=1 // loop_header_branch
      %14 = sbr.rel (%p12) target = $region8
    $region5: #{projection_fov.1} parent=1 // loop_body
      %s16 = ssub.s32 %s11, 1
      %s17 = ssub.s32 %s11, 2
      %s24 = sadd.s32 1, %s19
      %p25 = scmp.ge.s32.totalorder %s24, 1
      %s26 = scalar_select %p25, 0, %s24
      %s27 = sadd.s32 1, %s18
      %s28 = scalar_select %p25, %s27, %s18
      %p29 = scmp.ge.s32.totalorder %s28, 2
      %s30 = scalar_select %p29, 0, %s28
      %s32 = sadd.s32 %s31, 1
      %p35 = scmp.eq.s32.totalorder %s11, 1
      %p36 = scmp.ne.s32.totalorder %s31, %s33
      %p37 = scmp.eq.s32.totalorder %s11, 0
      %p38 = por %p36, %p37
      %p39 = scmp.ne.s32.totalorder %s31, %s33
      %p40 = scmp.eq.s32.totalorder %s16, 1
      %p41 = por %p39, %p40
      %p42 = scmp.ne.s32.totalorder %s33, %s34
      %p43 = scmp.eq.s32.totalorder %s16, 0
      %p44 = por %p42, %p43
      %p45 = scmp.ne.s32.totalorder %s33, %s34
      %p46 = scmp.eq.s32.totalorder %s17, 1
      %p47 = por %p45, %p46
      %p49 = scmp.ne.s32.totalorder %s34, %s48
      %p50 = scmp.eq.s32.totalorder %s17, 0
      %p51 = por %p49, %p50
      %s53 = sadd.s32 %s52, 1
      %p56 = scmp.eq.s32.totalorder %s11, 1
      %p57 = scmp.ne.s32.totalorder %s52, %s54
      %p58 = scmp.eq.s32.totalorder %s11, 0
      %p59 = por %p57, %p58
      %p60 = scmp.ne.s32.totalorder %s52, %s54
      %p61 = scmp.eq.s32.totalorder %s16, 1
      %p62 = por %p60, %p61
      %p63 = scmp.ne.s32.totalorder %s54, %s55
      %p64 = scmp.eq.s32.totalorder %s16, 0
      %p65 = por %p63, %p64
      %p66 = scmp.ne.s32.totalorder %s54, %s55
      %p67 = scmp.eq.s32.totalorder %s17, 1
      %p68 = por %p66, %p67
      %p70 = scmp.ne.s32.totalorder %s55, %s69
      %p71 = scmp.eq.s32.totalorder %s17, 0
      %p72 = por %p70, %p71
      %s73 = ssub.s32 %s18, %s30
      %s74 = ssub.s32 %s19, %s26
      %s75 = sor.u32 %s73, %s74
      %p76 = scmp.eq.s32.totalorder %s75, 0
      %s78 = sadd.s32 %s77, 1
      %s79 = scalar_select %p76, %s77, %s78
      %p82 = pneg %p76
      %p83 = scmp.eq.s32.totalorder %s11, 1
      %p84 = por %p82, %p83
      %p85 = scmp.ne.s32.totalorder %s77, %s80
      %p86 = scmp.eq.s32.totalorder %s11, 0
      %p87 = por %p85, %p86
      %p88 = scmp.ne.s32.totalorder %s77, %s80
      %p89 = scmp.eq.s32.totalorder %s16, 1
      %p90 = por %p88, %p89
      %p91 = scmp.ne.s32.totalorder %s80, %s81
      %p92 = scmp.eq.s32.totalorder %s16, 0
      %p93 = por %p91, %p92
      %p94 = scmp.ne.s32.totalorder %s80, %s81
      %p95 = scmp.eq.s32.totalorder %s17, 1
      %p96 = por %p94, %p95
      %p98 = scmp.ne.s32.totalorder %s81, %s97
      %p99 = scmp.eq.s32.totalorder %s17, 0
      %p100 = por %p98, %p99
      %s101 = ssub.s32 %s18, %s30
      %s102 = ssub.s32 %s19, %s26
      %s103 = sor.u32 %s101, %s102
      %p104 = scmp.eq.s32.totalorder %s103, 0
      %s106 = sadd.s32 %s105, 1
      %s107 = scalar_select %p104, %s105, %s106
      %p110 = pneg %p104
      %p111 = scmp.eq.s32.totalorder %s11, 1
      %p112 = por %p110, %p111
      %p113 = scmp.ne.s32.totalorder %s105, %s108
      %p114 = scmp.eq.s32.totalorder %s11, 0
      %p115 = por %p113, %p114
      %p116 = scmp.ne.s32.totalorder %s105, %s108
      %p117 = scmp.eq.s32.totalorder %s16, 1
      %p118 = por %p116, %p117
      %p119 = scmp.ne.s32.totalorder %s108, %s109
      %p120 = scmp.eq.s32.totalorder %s16, 0
      %p121 = por %p119, %p120
      %p122 = scmp.ne.s32.totalorder %s108, %s109
      %p123 = scmp.eq.s32.totalorder %s17, 1
      %p124 = por %p122, %p123
      %p126 = scmp.ne.s32.totalorder %s109, %s125
      %p127 = scmp.eq.s32.totalorder %s17, 0
      %p128 = por %p126, %p127
      %p129 = scmp.le.s32.totalorder 1, %s11
      %p130 = scmp.lt.s32.totalorder %s11, 3
      %p131 = pnand %p129, %p130
      %p132 = pneg %p131
      // Predicated region
      $region9: #{projection_fov.1} parent=5 // pred_check
        _
      $region10: #{projection_fov.1} parent=5 // pred_check_branch
        %134 = sbr.rel (%p131) target = $region12
      $region11: #{projection_fov.1} parent=5 // pred_region
        %s135 = ssub.s32 %s11, 1
        // Predicated region
        $region13: #{projection_fov.1} parent=11 // pred_check
          %p136 = pneg %p44
        $region14: #{projection_fov.1} parent=11 // pred_check_branch
          %138 = sbr.rel (%p136) target = $region16
        $region15: #{projection_fov.1} parent=11 // pred_region
          %s140 = ssub.s32 32, 32
          %141 = vsyncadd [#allocation3], %s140
          %s143 = sshll.u32 %s0, 4
          %s144 = int_to_ptr.vmem [resolvable:$true] %s143
          %146 = dma.vmem_to_smem %s144, 32, [#allocation2], [#allocation3]
        $region16: #{projection_fov.1} parent=11 // pred_fallthru
          _
        // Predicated region
        $region17: #{projection_fov.1} parent=11 // pred_check
          %p147 = pneg %p65
        $region18: #{projection_fov.1} parent=11 // pred_check_branch
          %149 = sbr.rel (%p147) target = $region20
        $region19: #{projection_fov.1} parent=11 // pred_region
          %s151 = ssub.s32 32, 32
          %152 = vsyncadd [#allocation5], %s151
          %s154 = sshll.u32 %s1, 4
          %s155 = int_to_ptr.vmem [resolvable:$true] %s154
          %157 = dma.vmem_to_smem %s155, 32, [#allocation4], [#allocation5]
        $region20: #{projection_fov.1} parent=11 // pred_fallthru
          _
      $region12: #{projection_fov.1} parent=5 // pred_fallthru
        _
      %p158 = scmp.lt.s32.totalorder %s11, 2
      // Predicated region
      $region21: #{projection_fov.1} parent=5 // pred_check
        %p159 = pneg %p158
      $region22: #{projection_fov.1} parent=5 // pred_check_branch
        %161 = sbr.rel (%p159) target = $region24
      $region23: #{projection_fov.1} parent=5 // pred_region
        // Predicated region
        $region25: #{projection_fov.1} parent=23 // pred_check
          %p162 = pneg %p87
        $region26: #{projection_fov.1} parent=23 // pred_check_branch
          %164 = sbr.rel (%p162) target = $region28
        $region27: #{projection_fov.1} parent=23 // pred_region
          %p165 = scmp.lt.s32.totalorder %s18, 1
          %s166 = scalar_select %p165, %s18, 1
          %p167 = scmp.lt.s32.totalorder %s19, 0
          %s168 = scalar_select %p167, %s19, 0
          %s169 = smul.addr %s166, 3
          %s170 = sadd.s32 %s168, %s169
          %s171 = smul.addr %s170, 2
          %s172 = scalar_lea.vmem %s2, %s171
        $region28: #{projection_fov.1} parent=23 // pred_fallthru
          _
      $region24: #{projection_fov.1} parent=5 // pred_fallthru
        _
      %p173 = scmp.le.s32.totalorder 1, %s11
      %p174 = scmp.lt.s32.totalorder %s11, 3
      %p175 = pnand %p173, %p174
      %p176 = pneg %p175
      // Predicated region
      $region29: #{projection_fov.1} parent=5 // pred_check
        _
      $region30: #{projection_fov.1} parent=5 // pred_check_branch
        %178 = sbr.rel (%p175) target = $region32
      $region31: #{projection_fov.1} parent=5 // pred_region
        %s179 = ssub.s32 %s11, 1
        // Predicated region
        $region33: #{projection_fov.1} parent=31 // pred_check
          %p180 = pneg %p44
        $region34: #{projection_fov.1} parent=31 // pred_check_branch
          %182 = sbr.rel (%p180) target = $region36
        $region35: #{projection_fov.1} parent=31 // pred_region
          %183 = dma.done [#allocation3], 32
        $region36: #{projection_fov.1} parent=31 // pred_fallthru
          _
        // Predicated region
        $region37: #{projection_fov.1} parent=31 // pred_check
          %p184 = pneg %p65
        $region38: #{projection_fov.1} parent=31 // pred_check_branch
          %186 = sbr.rel (%p184) target = $region40
        $region39: #{projection_fov.1} parent=31 // pred_region
          %187 = dma.done [#allocation5], 32
        $region40: #{projection_fov.1} parent=31 // pred_fallthru
          _
        %188 = sfence
        %p189 = pneg %p44
        %p190 = pneg %p41
        %p191 = pneg %p65
        %p192 = pneg %p62
        %p193 = scmp.lt.s32.totalorder %s20, 1
        %s194 = scalar_select %p193, %s20, 1
        %p195 = scmp.lt.s32.totalorder %s21, 0
        %s196 = scalar_select %p195, %s21, 0
        %s197 = smul.addr %s194, 3
        %s198 = sadd.s32 %s196, %s197
        %s199 = smul.addr %s198, 2
        %s200 = scalar_lea.vmem %s2, %s199
        %p201 = pneg %p93
        %p202 = pneg %p90
        %p203 = pneg %p121
        %p204 = pneg %p118
        %p205 = scmp.lt.s32.totalorder %s20, 1
        %s206 = scalar_select %p205, %s20, 1
        %p207 = scmp.lt.s32.totalorder %s21, 0
        %s208 = scalar_select %p207, %s21, 0
        %s209 = smul.addr %s206, 3
        %s210 = sadd.s32 %s208, %s209
        %s211 = smul.addr %s210, 2
        %s212 = scalar_lea.vmem %s3, %s211
        %p213 = scmp.lt.s32.totalorder %s20, 1
        %s214 = scalar_select %p213, %s20, 1
        %p215 = scmp.lt.s32.totalorder %s21, 0
        %s216 = scalar_select %p215, %s21, 0
        %s217 = smul.addr %s214, 3
        %s218 = sadd.s32 %s216, %s217
        %s219 = smul.addr %s218, 2
        %s220 = scalar_lea.vmem %s2, %s219
        %p221 = scmp.lt.s32.totalorder %s20, 1
        %s222 = scalar_select %p221, %s20, 1
        %p223 = scmp.lt.s32.totalorder %s21, 0
        %s224 = scalar_select %p223, %s21, 0
        %s225 = smul.addr %s222, 3
        %s226 = sadd.s32 %s224, %s225
        %s227 = smul.addr %s226, 2
        %s228 = scalar_lea.vmem %s3, %s227
        %s229 = smul.u32 %s20, 128
        %s230 = sld [smem:[#allocation2 + %s229]]
        %s231 = sadd.s32 %s229, 1
        %s232 = sld [smem:[#allocation2 + %s231]]
        %s233 = sadd.s32 %s229, 2
        %s234 = sld [smem:[#allocation2 + %s233]]
        %s235 = sadd.s32 %s229, 3
        %s236 = sld [smem:[#allocation2 + %s235]]
        %s237 = sadd.s32 %s229, 4
        %s238 = sld [smem:[#allocation2 + %s237]]
        %s239 = sadd.s32 %s229, 5
        %s240 = sld [smem:[#allocation2 + %s239]]
        %s241 = sadd.s32 %s229, 6
        %s242 = sld [smem:[#allocation2 + %s241]]
        %s243 = sadd.s32 %s229, 7
        %s244 = sld [smem:[#allocation2 + %s243]]
        %s245 = sadd.s32 %s229, 8
        %s246 = sld [smem:[#allocation2 + %s245]]
        %s247 = sld [smem:[#allocation4 + %s229]]
        %s248 = sld [smem:[#allocation4 + %s231]]
        %s249 = sld [smem:[#allocation4 + %s233]]
        %v250 = vld [vmem:[%s220] sm:$0x3]
        %s251 = scalar_lea.vmem %s220, 2
        %v252 = vld [vmem:[%s251] sm:$0x3]
        %s253 = scalar_lea.vmem %s220, 4
        %v254 = vld [vmem:[%s253] sm:$0x3]
        %v255 = vstv %s230
        %v256 = vmul.f32 %v255, %v250
        %v257 = vstv %s232
        %v258 = vmul.f32 %v257, %v252
        %v259 = vadd.f32 %v256, %v258
        %v260 = vstv %s234
        %v261 = vmul.f32 %v260, %v254
        %v262 = vadd.f32 %v259, %v261
        %v263 = vstv %s247
        %v264 = vadd.f32 %v262, %v263
        %v265 = vstv %s236
        %v266 = vmul.f32 %v265, %v250
        %v267 = vstv %s238
        %v268 = vmul.f32 %v267, %v252
        %v269 = vadd.f32 %v266, %v268
        %v270 = vstv %s240
        %v271 = vmul.f32 %v270, %v254
        %v272 = vadd.f32 %v269, %v271
        %v273 = vstv %s248
        %v274 = vadd.f32 %v272, %v273
        %v275 = vstv %s242
        %v276 = vmul.f32 %v275, %v250
        %v277 = vstv %s244
        %v278 = vmul.f32 %v277, %v252
        %v279 = vadd.f32 %v276, %v278
        %v280 = vstv %s246
        %v281 = vmul.f32 %v280, %v254
        %v282 = vadd.f32 %v279, %v281
        %v283 = vstv %s249
        %v284 = vadd.f32 %v282, %v283
        %v285 = vrcp.pop %v284
        %v286 = vmul.f32 %v264, %v285
        %287 = vst [vmem:[%s228] sm:$0x3] %v286
        %v288 = vmul.f32 %v274, %v285
        %s289 = scalar_lea.vmem %s228, 2
        %290 = vst [vmem:[%s289] sm:$0x3] %v288
        %s291 = scalar_lea.vmem %s228, 4
        %292 = vst [vmem:[%s291] sm:$0x3] %v284
        %p293 = scmp.lt.s32.totalorder %s20, 1
        %s294 = scalar_select %p293, %s20, 1
        %p295 = scmp.lt.s32.totalorder %s21, 0
        %s296 = scalar_select %p295, %s21, 0
        %s297 = smul.addr %s294, 3
        %s298 = sadd.s32 %s296, %s297
        %s299 = smul.addr %s298, 2
        %s300 = scalar_lea.vmem %s3, %s299
        // Predicated region
        $region41: #{projection_fov.1} parent=31 // pred_check
          %p301 = pneg %p118
        $region42: #{projection_fov.1} parent=31 // pred_check_branch
          %303 = sbr.rel (%p301) target = $region44
        $region43: #{projection_fov.1} parent=31 // pred_region
          _
        $region44: #{projection_fov.1} parent=31 // pred_fallthru
          _
      $region32: #{projection_fov.1} parent=5 // pred_fallthru
        _
      %p304 = scmp.le.s32.totalorder 2, %s11
      // Predicated region
      $region45: #{projection_fov.1} parent=5 // pred_check
        %p305 = pneg %p304
      $region46: #{projection_fov.1} parent=5 // pred_check_branch
        %307 = sbr.rel (%p305) target = $region48
      $region47: #{projection_fov.1} parent=5 // pred_region
        %s308 = ssub.s32 %s11, 2
        // Predicated region
        $region49: #{projection_fov.1} parent=47 // pred_check
          %p309 = pneg %p124
        $region50: #{projection_fov.1} parent=47 // pred_check_branch
          %311 = sbr.rel (%p309) target = $region52
        $region51: #{projection_fov.1} parent=47 // pred_region
          %p312 = scmp.lt.s32.totalorder %s22, 1
          %s313 = scalar_select %p312, %s22, 1
          %p314 = scmp.lt.s32.totalorder %s23, 0
          %s315 = scalar_select %p314, %s23, 0
          %s316 = smul.addr %s313, 3
          %s317 = sadd.s32 %s315, %s316
          %s318 = smul.addr %s317, 2
          %s319 = scalar_lea.vmem %s3, %s318
        $region52: #{projection_fov.1} parent=47 // pred_fallthru
          _
      $region48: #{projection_fov.1} parent=5 // pred_fallthru
        _
    $region6: #{projection_fov.1} parent=1 // loop_footer
      %s15 = sadd.s32 1, %s11
    $region7: #{projection_fov.1} parent=1 // loop_footer_branch
      %10 = sbr.rel target = $region3
    $region8: #{projection_fov.1} parent=1 // loop_exit
      _
    %320 = vsyncpa [#allocation3], 1
    %s321 = scalar_lea.sflag [#allocation3], 1
    %322 = vsyncpa %s321, 1
    %323 = vsyncpa [#allocation5], 1

</llo_original>
